<compile_context>
chip_gen: v7x
topology: tpu7x:2x2x1
jax: 0.10.0
libtpu: 0.0.40
codegen_flags: <defaults>
</compile_context>

<pallas_src>
import jax
import jax.numpy as jnp
from jax import lax
from jax.experimental import pallas as pl
from jax.experimental.pallas import tpu as pltpu

# ----------------------------- problem sizes --------------------------------
B = 2                      # batch
H, W = 10, 20              # input spatial (NCHW: (B, 1, H, W))
C1, C2 = 32, 64            # conv channels
K1, K2 = 4, 2              # conv kernel sizes
OUT_DIM = 4                # number of actions

H1, W1 = H - K1 + 1, W - K1 + 1        # conv1 out: 7, 17
P1H, P1W = H1 // 2, W1 // 2            # pool1 out: 3, 8
H2, W2 = P1H - K2 + 1, P1W - K2 + 1    # conv2 out: 2, 7
P2H, P2W = H2 // 2, W2 // 2            # pool2 out: 1, 3
FLAT = C2 * P2H * P2W                  # 192
HID = 64

NP = B * P1W               # 16: rows per ow-parity block; also p1/c2 row count

# "rest" slab row offsets (bf16, lane width 128; all offsets multiples of 16)
R_W20 = 0                  # conv2 banded weight, kw = 0       (96 rows)
R_W21 = R_W20 + P1H * C1   # conv2 banded weight, kw = 1       (96 rows)
R_WH1 = R_W21 + P1H * C1   # fused V|A head layer 1            (192 rows)
R_WQ = R_WH1 + FLAT        # folded dueling head layer 2       (128 rows)
REST_ROWS = R_WQ + 2 * HID  # 512

# bias buffer lane offsets (f32, (1, 512); all starts 128-aligned)
L_B1 = 0                   # conv1 bias tiled x P1H  (96 lanes)
L_B2 = 128                 # conv2 bias              (64 lanes)
L_BH1 = 256                # fused head-1 bias       (128 lanes)
L_BQ = 384                 # folded head-2 bias      (4 lanes)

HIGHEST = lax.Precision.HIGHEST        # reference only


# ------------------------------- the kernel ---------------------------------
def dueling_dqn_kernel(x1_ref, w1_ref, rest_ref, bias_ref, q_ref):
    f32, bf16 = jnp.float32, jnp.bfloat16

    x1 = x1_ref[...]                                     # (32, 40) bf16
    b1t = bias_ref[0:1, L_B1:L_B1 + P1H * C1]            # (1, 96)  f32
    b2 = bias_ref[0:1, L_B2:L_B2 + C2]                   # (1, 64)
    bh1 = bias_ref[0:1, L_BH1:L_BH1 + 2 * HID]           # (1, 128)
    bq = bias_ref[0:1, L_BQ:L_BQ + OUT_DIM]              # (1, 4)

    # ---- conv1 + pool1 + bias + ReLU (no shuffles at all) ----
    # x1 rows: parity*16 + b*8 + j (ow = 2j + parity); w1_ref[0]/[1] hold the
    # banded weights for the even / odd conv1 output rows oh, so the 2x2 pool
    # is one max over the two matmul results (oh) + one max over the two
    # 8-aligned parity row halves (ow).
    c1a = jnp.dot(x1, w1_ref[0], preferred_element_type=f32)      # (32, 96)
    c1b = jnp.dot(x1, w1_ref[1], preferred_element_type=f32)      # (32, 96)
    lp = jnp.maximum(c1a, c1b)                                    # pool over oh
    p1 = jnp.maximum(jnp.maximum(lp[0:NP, :], lp[NP:2 * NP, :]) + b1t, 0.0)
    # p1[b*8 + j, i*C1 + c] = pooled1[b, c, i, j]                   (16, 96) f32

    # ---- conv2: banded weights; the kw=1 tap comes from a sublane roll ----
    p1s = pltpu.roll(p1, shift=NP - 1, axis=0)            # row r -> p1[r + 1]
    c2 = (jnp.dot(p1.astype(bf16), rest_ref[R_W20:R_W20 + P1H * C1, :],
                  preferred_element_type=f32) +
          jnp.dot(p1s.astype(bf16), rest_ref[R_W21:R_W21 + P1H * C1, :],
                  preferred_element_type=f32))
    # c2[b*8 + q, p*C2 + o] = conv2[b, o, p, q]  (rows q >= 6 are junk) (16,128)

    # ---- pool2 + bias + ReLU ----
    m1 = jnp.maximum(c2[:, 0:C2], c2[:, C2:2 * C2])               # max over p
    m2 = jnp.maximum(m1, pltpu.roll(m1, shift=NP - 1, axis=0))    # max over q pair
    f2 = jnp.maximum(m2 + b2, 0.0)
    # f2[b*8 + 2*jj, o] = flat feature (o, jj); other rows junk     (16, 64) f32

    # ---- fused dueling heads ----
    # Layer 1 as a sum over the P2W = 3 pooled columns jj; rolls bring row
    # b*8 + 2*jj onto row b*8, so valid results live at rows 0 and 8 only.
    h = jnp.dot(f2.astype(bf16), rest_ref[R_WH1:R_WH1 + HID, :],
                preferred_element_type=f32)
    h = h + jnp.dot(pltpu.roll(f2, shift=NP - 2, axis=0).astype(bf16),
                    rest_ref[R_WH1 + HID:R_WH1 + 2 * HID, :],
                    preferred_element_type=f32)
    h = h + jnp.dot(pltpu.roll(f2, shift=NP - 4, axis=0).astype(bf16),
                    rest_ref[R_WH1 + 2 * HID:R_WH1 + 3 * HID, :],
                    preferred_element_type=f32)
    h1 = jnp.maximum(h + bh1, 0.0)                                # (16, 128)

    # Layer 2 with the dueling combine v + (a - mean(a)) folded into wq/bq.
    q = jnp.dot(h1.astype(bf16), rest_ref[R_WQ:R_WQ + 2 * HID, :],
                preferred_element_type=f32)[:, 0:OUT_DIM] + bq    # (16, 4)
    q_ref[...] = jnp.concatenate([q[0:1, :], q[P1W:P1W + 1, :]], axis=0)


# -------------------------- glue: params & packing ---------------------------
def init_params(key):
    ks = jax.random.split(key, 12)

    def u(k, shape, fan_in):
        bound = 1.0 / jnp.sqrt(jnp.float32(fan_in))
        return jax.random.uniform(k, shape, jnp.float32, -bound, bound)

    return {
        "w1": u(ks[0], (C1, 1, K1, K1), 1 * K1 * K1),
        "b1": u(ks[1], (C1,), 1 * K1 * K1),
        "w2": u(ks[2], (C2, C1, K2, K2), C1 * K2 * K2),
        "b2": u(ks[3], (C2,), C1 * K2 * K2),
        "wv1": u(ks[4], (HID, FLAT), FLAT),
        "bv1": u(ks[5], (HID,), FLAT),
        "wv2": u(ks[6], (1, HID), HID),
        "bv2": u(ks[7], (1,), HID),
        "wa1": u(ks[8], (HID, FLAT), FLAT),
        "ba1": u(ks[9], (HID,), FLAT),
        "wa2": u(ks[10], (OUT_DIM, HID), HID),
        "ba2": u(ks[11], (OUT_DIM,), HID),
    }


def pack_params(p):
    """Pack weights into (2,40,96) + (512,128) bf16 slabs and a (1,512) f32 bias row."""
    f32 = jnp.float32

    # conv1 banded weights, one per output-row parity:
    #   w1[par][kw*H + h, i*C1 + c] = w1_torch[c, 0, h - (2i + par), kw]  (in band)
    w1t = jnp.transpose(p["w1"][:, 0], (2, 1, 0))           # (kw, kh, c)
    w1a = jnp.zeros((K1 * H, P1H * C1), f32)
    w1b = jnp.zeros((K1 * H, P1H * C1), f32)
    for i in range(P1H):
        for kw in range(K1):
            w1a = w1a.at[kw * H + 2 * i: kw * H + 2 * i + K1,
                         i * C1:(i + 1) * C1].set(w1t[kw])
            w1b = w1b.at[kw * H + 2 * i + 1: kw * H + 2 * i + 1 + K1,
                         i * C1:(i + 1) * C1].set(w1t[kw])
    w1 = jnp.stack([w1a, w1b]).astype(jnp.bfloat16)          # (2, 40, 96)

    # conv2 banded weights, one per kw:
    #   w2k[kw][i*C1 + c, p*C2 + o] = w2_torch[o, c, i - p, kw]  (0 <= i-p < K2)
    w2t = jnp.transpose(p["w2"], (2, 1, 3, 0))               # (kh, c, kw, o)
    w2k = [jnp.zeros((P1H * C1, 2 * C2), f32) for _ in range(K2)]
    for pp in range(H2):
        for kh in range(K2):
            i = pp + kh
            for kw in range(K2):
                w2k[kw] = w2k[kw].at[i * C1:(i + 1) * C1,
                                     pp * C2:(pp + 1) * C2].set(w2t[kh, :, kw, :])

    # fused V|A head layer 1, rows ordered (jj, o) to match the kernel layout
    def head1(w):        # torch layout (HID, FLAT); FLAT flattens as (o, jj)
        return jnp.transpose(w.reshape(HID, C2, P2W), (2, 1, 0)).reshape(FLAT, HID)
    wh1 = jnp.concatenate([head1(p["wv1"]), head1(p["wa1"])], axis=1)   # (192, 128)

    # head layer 2 with the dueling combine folded in:  q = h1 @ wq + bq
    wa2c = p["wa2"] - jnp.mean(p["wa2"], axis=0, keepdims=True)          # (4, 64)
    wq = jnp.concatenate([jnp.tile(p["wv2"].T, (1, OUT_DIM)), wa2c.T], axis=0)
    wq = jnp.pad(wq, ((0, 0), (0, 2 * C2 - OUT_DIM)))                    # (128, 128)
    bq = p["bv2"][0] + p["ba2"] - jnp.mean(p["ba2"])                     # (4,)

    rest = jnp.concatenate([w2k[0], w2k[1], wh1, wq], axis=0).astype(jnp.bfloat16)
    assert rest.shape == (REST_ROWS, 2 * C2)

    biases = jnp.zeros((1, 512), f32)
    biases = biases.at[0, L_B1:L_B1 + P1H * C1].set(jnp.tile(p["b1"], P1H))
    biases = biases.at[0, L_B2:L_B2 + C2].set(p["b2"])
    biases = biases.at[0, L_BH1:L_BH1 + 2 * HID].set(
        jnp.concatenate([p["bv1"], p["ba1"]]))
    biases = biases.at[0, L_BQ:L_BQ + OUT_DIM].set(bq)
    return w1, rest, biases


@jax.jit
def dueling_dqn_pallas(x_nchw, w1, rest, biases):
    # conv1 im2col hoisted to XLA (pure layout, fused with the old transpose):
    # x1[par*16 + b*8 + j, kw*H + h] = x[b, 0, h, 2j + par + kw]
    xs = x_nchw[:, 0, :, :]                                 # (B, H, W)
    par = jnp.arange(2).reshape(2, 1, 1, 1, 1)
    bb = jnp.arange(B).reshape(1, B, 1, 1, 1)
    jj = jnp.arange(P1W).reshape(1, 1, P1W, 1, 1)
    kw = jnp.arange(K1).reshape(1, 1, 1, K1, 1)
    hh = jnp.arange(H).reshape(1, 1, 1, 1, H)
    x1 = xs[bb, hh, 2 * jj + par + kw]                      # (2, B, 8, 4, 10)
    x1 = x1.reshape(2 * B * P1W, K1 * H).astype(jnp.bfloat16)

    return pl.pallas_call(
        dueling_dqn_kernel,
        out_shape=jax.ShapeDtypeStruct((B, OUT_DIM), jnp.float32),
        in_specs=[pl.BlockSpec(memory_space=pltpu.MemorySpace.VMEM)] * 4,
        out_specs=pl.BlockSpec(memory_space=pltpu.MemorySpace.VMEM),
    )(x1, w1, rest, biases)


# -------------------------- pure-JAX reference -------------------------------
def ref_forward(x, p):
    dn = ("NCHW", "OIHW", "NCHW")

    def pool2x2(y):
        y = y[:, :, :(y.shape[2] // 2) * 2, :(y.shape[3] // 2) * 2]
        b, c, h, w = y.shape
        return y.reshape(b, c, h // 2, 2, w // 2, 2).max(axis=(3, 5))

    y = lax.conv_general_dilated(x, p["w1"], (1, 1), "VALID",
                                 dimension_numbers=dn, precision=HIGHEST)
    y = pool2x2(jnp.maximum(y + p["b1"][None, :, None, None], 0.0))
    y = lax.conv_general_dilated(y, p["w2"], (1, 1), "VALID",
                                 dimension_numbers=dn, precision=HIGHEST)
    y = pool2x2(jnp.maximum(y + p["b2"][None, :, None, None], 0.0))
    flat = y.reshape(y.shape[0], -1)
    v = jnp.maximum(jnp.dot(flat, p["wv1"].T, precision=HIGHEST) + p["bv1"], 0.0)
    v = jnp.dot(v, p["wv2"].T, precision=HIGHEST) + p["bv2"]
    a = jnp.maximum(jnp.dot(flat, p["wa1"].T, precision=HIGHEST) + p["ba1"], 0.0)
    a = jnp.dot(a, p["wa2"].T, precision=HIGHEST) + p["ba2"]
    return v + (a - a.mean(axis=1, keepdims=True))


# ---------------------------------- main -------------------------------------
if __name__ == "__main__":
    key = jax.random.PRNGKey(0)
    pkey, xkey = jax.random.split(key)
    params = init_params(pkey)
    x = jax.random.normal(xkey, (B, 1, H, W), jnp.float32)

    w1, rest, biases = jax.block_until_ready(pack_params(params))
    q = jax.block_until_ready(dueling_dqn_pallas(x, w1, rest, biases))
    q_ref = jax.block_until_ready(ref_forward(x, params))

    assert q.shape == (B, OUT_DIM)
    # Kernel runs bf16 MXU passes with f32 accumulation; the reference runs at
    # HIGHEST precision, so allow bf16-level numerical slack.  Structural bugs
    # produce O(1) errors and still fail this check.
    if not jnp.allclose(q, q_ref, rtol=3e-2, atol=3e-2):
        raise AssertionError(f"Pallas kernel mismatch:\n{q}\nvs reference:\n{q_ref}")
    print("KERNEL_OK")
</pallas_src>

<mosaic_0001>
module attributes {stable_mosaic.version = 11 : i64} {
  func.func @dueling_dqn_kernel(%arg0: memref<32x40xbf16, #tpu.memory_space<vmem>>, %arg1: memref<2x40x96xbf16, #tpu.memory_space<vmem>>, %arg2: memref<512x128xbf16, #tpu.memory_space<vmem>>, %arg3: memref<1x512xf32, #tpu.memory_space<vmem>>, %arg4: memref<2x4xf32, #tpu.memory_space<vmem>>) attributes {dimension_semantics = [], scalar_prefetch = 0 : i64, scratch_operands = 0 : i64, tpu.core_type = #tpu.core_type<tc>} {
    %c0 = arith.constant 0 : index
    %c0_0 = arith.constant 0 : index
    %0 = vector.load %arg0[%c0, %c0_0] : memref<32x40xbf16, #tpu.memory_space<vmem>>, vector<32x40xbf16>
    %c0_1 = arith.constant 0 : index
    %c0_2 = arith.constant 0 : index
    %1 = vector.load %arg3[%c0_1, %c0_2] : memref<1x512xf32, #tpu.memory_space<vmem>>, vector<1x96xf32>
    %c0_3 = arith.constant 0 : index
    %c128 = arith.constant 128 : index
    %2 = vector.load %arg3[%c0_3, %c128] : memref<1x512xf32, #tpu.memory_space<vmem>>, vector<1x64xf32>
    %c0_4 = arith.constant 0 : index
    %c256 = arith.constant 256 : index
    %3 = vector.load %arg3[%c0_4, %c256] : memref<1x512xf32, #tpu.memory_space<vmem>>, vector<1x128xf32>
    %c0_5 = arith.constant 0 : index
    %c384 = arith.constant 384 : index
    %4 = vector.load %arg3[%c0_5, %c384] : memref<1x512xf32, #tpu.memory_space<vmem>>, vector<1x4xf32>
    %c0_6 = arith.constant 0 : index
    %c0_7 = arith.constant 0 : index
    %c0_8 = arith.constant 0 : index
    %5 = vector.load %arg1[%c0_6, %c0_7, %c0_8] : memref<2x40x96xbf16, #tpu.memory_space<vmem>>, vector<1x40x96xbf16>
    %6 = vector.shape_cast %5 : vector<1x40x96xbf16> to vector<40x96xbf16>
    %cst = arith.constant dense<0.000000e+00> : vector<32x96xf32>
    %7 = tpu.matmul %0, %6, %cst {dimension_numbers = #tpu.dot_dimension_numbers<[1], [0], [0], [1], [0, 0, 1, 1], [], []>} : vector<32x40xbf16>, vector<40x96xbf16>, vector<32x96xf32> -> vector<32x96xf32>
    %c1 = arith.constant 1 : index
    %c0_9 = arith.constant 0 : index
    %c0_10 = arith.constant 0 : index
    %8 = vector.load %arg1[%c1, %c0_9, %c0_10] : memref<2x40x96xbf16, #tpu.memory_space<vmem>>, vector<1x40x96xbf16>
    %9 = vector.shape_cast %8 : vector<1x40x96xbf16> to vector<40x96xbf16>
    %cst_11 = arith.constant dense<0.000000e+00> : vector<32x96xf32>
    %10 = tpu.matmul %0, %9, %cst_11 {dimension_numbers = #tpu.dot_dimension_numbers<[1], [0], [0], [1], [0, 0, 1, 1], [], []>} : vector<32x40xbf16>, vector<40x96xbf16>, vector<32x96xf32> -> vector<32x96xf32>
    %11 = arith.maximumf %7, %10 : vector<32x96xf32>
    %12 = vector.extract_strided_slice %11 {offsets = [0, 0], sizes = [16, 96], strides = [1, 1]} : vector<32x96xf32> to vector<16x96xf32>
    %13 = vector.extract_strided_slice %11 {offsets = [16, 0], sizes = [16, 96], strides = [1, 1]} : vector<32x96xf32> to vector<16x96xf32>
    %14 = arith.maximumf %12, %13 : vector<16x96xf32>
    %15 = vector.broadcast %1 : vector<1x96xf32> to vector<16x96xf32>
    %16 = arith.addf %14, %15 : vector<16x96xf32>
    %cst_12 = arith.constant 0.000000e+00 : f32
    %17 = vector.broadcast %cst_12 : f32 to vector<16x96xf32>
    %18 = arith.maximumf %16, %17 : vector<16x96xf32>
    %c15_i32 = arith.constant 15 : i32
    %19 = tpu.dynamic_rotate %18 by %c15_i32 dim 0 : vector<16x96xf32>, i32 -> vector<16x96xf32>
    %20 = arith.truncf %18 : vector<16x96xf32> to vector<16x96xbf16>
    %c0_13 = arith.constant 0 : index
    %c0_14 = arith.constant 0 : index
    %21 = vector.load %arg2[%c0_13, %c0_14] : memref<512x128xbf16, #tpu.memory_space<vmem>>, vector<96x128xbf16>
    %cst_15 = arith.constant dense<0.000000e+00> : vector<16x128xf32>
    %22 = tpu.matmul %20, %21, %cst_15 {dimension_numbers = #tpu.dot_dimension_numbers<[1], [0], [0], [1], [0, 0, 1, 1], [], []>} : vector<16x96xbf16>, vector<96x128xbf16>, vector<16x128xf32> -> vector<16x128xf32>
    %23 = arith.truncf %19 : vector<16x96xf32> to vector<16x96xbf16>
    %c96 = arith.constant 96 : index
    %c0_16 = arith.constant 0 : index
    %24 = vector.load %arg2[%c96, %c0_16] : memref<512x128xbf16, #tpu.memory_space<vmem>>, vector<96x128xbf16>
    %cst_17 = arith.constant dense<0.000000e+00> : vector<16x128xf32>
    %25 = tpu.matmul %23, %24, %cst_17 {dimension_numbers = #tpu.dot_dimension_numbers<[1], [0], [0], [1], [0, 0, 1, 1], [], []>} : vector<16x96xbf16>, vector<96x128xbf16>, vector<16x128xf32> -> vector<16x128xf32>
    %26 = arith.addf %22, %25 : vector<16x128xf32>
    %27 = vector.extract_strided_slice %26 {offsets = [0, 0], sizes = [16, 64], strides = [1, 1]} : vector<16x128xf32> to vector<16x64xf32>
    %28 = vector.extract_strided_slice %26 {offsets = [0, 64], sizes = [16, 64], strides = [1, 1]} : vector<16x128xf32> to vector<16x64xf32>
    %29 = arith.maximumf %27, %28 : vector<16x64xf32>
    %c15_i32_18 = arith.constant 15 : i32
    %30 = tpu.dynamic_rotate %29 by %c15_i32_18 dim 0 : vector<16x64xf32>, i32 -> vector<16x64xf32>
    %31 = arith.maximumf %29, %30 : vector<16x64xf32>
    %32 = vector.broadcast %2 : vector<1x64xf32> to vector<16x64xf32>
    %33 = arith.addf %31, %32 : vector<16x64xf32>
    %cst_19 = arith.constant 0.000000e+00 : f32
    %34 = vector.broadcast %cst_19 : f32 to vector<16x64xf32>
    %35 = arith.maximumf %33, %34 : vector<16x64xf32>
    %36 = arith.truncf %35 : vector<16x64xf32> to vector<16x64xbf16>
    %c192 = arith.constant 192 : index
    %c0_20 = arith.constant 0 : index
    %37 = vector.load %arg2[%c192, %c0_20] : memref<512x128xbf16, #tpu.memory_space<vmem>>, vector<64x128xbf16>
    %cst_21 = arith.constant dense<0.000000e+00> : vector<16x128xf32>
    %38 = tpu.matmul %36, %37, %cst_21 {dimension_numbers = #tpu.dot_dimension_numbers<[1], [0], [0], [1], [0, 0, 1, 1], [], []>} : vector<16x64xbf16>, vector<64x128xbf16>, vector<16x128xf32> -> vector<16x128xf32>
    %c14_i32 = arith.constant 14 : i32
    %39 = tpu.dynamic_rotate %35 by %c14_i32 dim 0 : vector<16x64xf32>, i32 -> vector<16x64xf32>
    %40 = arith.truncf %39 : vector<16x64xf32> to vector<16x64xbf16>
    %c256_22 = arith.constant 256 : index
    %c0_23 = arith.constant 0 : index
    %41 = vector.load %arg2[%c256_22, %c0_23] : memref<512x128xbf16, #tpu.memory_space<vmem>>, vector<64x128xbf16>
    %cst_24 = arith.constant dense<0.000000e+00> : vector<16x128xf32>
    %42 = tpu.matmul %40, %41, %cst_24 {dimension_numbers = #tpu.dot_dimension_numbers<[1], [0], [0], [1], [0, 0, 1, 1], [], []>} : vector<16x64xbf16>, vector<64x128xbf16>, vector<16x128xf32> -> vector<16x128xf32>
    %43 = arith.addf %38, %42 : vector<16x128xf32>
    %c12_i32 = arith.constant 12 : i32
    %44 = tpu.dynamic_rotate %35 by %c12_i32 dim 0 : vector<16x64xf32>, i32 -> vector<16x64xf32>
    %45 = arith.truncf %44 : vector<16x64xf32> to vector<16x64xbf16>
    %c320 = arith.constant 320 : index
    %c0_25 = arith.constant 0 : index
    %46 = vector.load %arg2[%c320, %c0_25] : memref<512x128xbf16, #tpu.memory_space<vmem>>, vector<64x128xbf16>
    %cst_26 = arith.constant dense<0.000000e+00> : vector<16x128xf32>
    %47 = tpu.matmul %45, %46, %cst_26 {dimension_numbers = #tpu.dot_dimension_numbers<[1], [0], [0], [1], [0, 0, 1, 1], [], []>} : vector<16x64xbf16>, vector<64x128xbf16>, vector<16x128xf32> -> vector<16x128xf32>
    %48 = arith.addf %43, %47 : vector<16x128xf32>
    %49 = vector.broadcast %3 : vector<1x128xf32> to vector<16x128xf32>
    %50 = arith.addf %48, %49 : vector<16x128xf32>
    %cst_27 = arith.constant 0.000000e+00 : f32
    %51 = vector.broadcast %cst_27 : f32 to vector<16x128xf32>
    %52 = arith.maximumf %50, %51 : vector<16x128xf32>
    %53 = arith.truncf %52 : vector<16x128xf32> to vector<16x128xbf16>
    %c384_28 = arith.constant 384 : index
    %c0_29 = arith.constant 0 : index
    %54 = vector.load %arg2[%c384_28, %c0_29] : memref<512x128xbf16, #tpu.memory_space<vmem>>, vector<128x128xbf16>
    %cst_30 = arith.constant dense<0.000000e+00> : vector<16x128xf32>
    %55 = tpu.matmul %53, %54, %cst_30 {dimension_numbers = #tpu.dot_dimension_numbers<[1], [0], [0], [1], [0, 0, 1, 1], [], []>} : vector<16x128xbf16>, vector<128x128xbf16>, vector<16x128xf32> -> vector<16x128xf32>
    %56 = vector.extract_strided_slice %55 {offsets = [0, 0], sizes = [16, 4], strides = [1, 1]} : vector<16x128xf32> to vector<16x4xf32>
    %57 = vector.broadcast %4 : vector<1x4xf32> to vector<16x4xf32>
    %58 = arith.addf %56, %57 : vector<16x4xf32>
    %59 = vector.extract_strided_slice %58 {offsets = [0, 0], sizes = [1, 4], strides = [1, 1]} : vector<16x4xf32> to vector<1x4xf32>
    %60 = vector.extract_strided_slice %58 {offsets = [8, 0], sizes = [1, 4], strides = [1, 1]} : vector<16x4xf32> to vector<1x4xf32>
    %61 = tpu.concatenate %59, %60 in 0 : vector<1x4xf32>, vector<1x4xf32> -> vector<2x4xf32>
    %c0_31 = arith.constant 0 : index
    %c0_32 = arith.constant 0 : index
    %62 = vector.load %arg4[%c0_31, %c0_32] : memref<2x4xf32, #tpu.memory_space<vmem>>, vector<2x4xf32>
    tpu.vector_store %arg4[%c0_31, %c0_32], %61 {strides = array<i32>} : memref<2x4xf32, #tpu.memory_space<vmem>>, vector<2x4xf32>,
    return
  }
}

</mosaic_0001>

<llo_original>
// kernel: dueling_dqn_pallas.1
$region0: #{dueling_dqn_pallas.1}
  #allocation0 [shape = 'u32[]', space=smem, size = 0x4, offset = 0x4, fixed_abs, tag = 'smem constant byte address 0x4 - core index']
  #allocation1 [shape = 'u32[144,128]{1,0:T(1,128)}', space=vmem, size = 0x12000, scoped, tag = 'internal scratch']
  %s0 = inlined_call_operand.vmem [shape: bf16[32,40], index: 0, kind: input, shape index: {}]
  %s1 = inlined_call_operand.vmem [shape: bf16[2,40,96], index: 1, kind: input, shape index: {}]
  %s2 = inlined_call_operand.vmem [shape: bf16[512,128], index: 2, kind: input, shape index: {}]
  %s3 = inlined_call_operand.vmem [shape: f32[1,512], index: 3, kind: input, shape index: {}]
  %s4 = inlined_call_operand.hbm [shape: f32[2,4], index: 4, kind: output, shape index: {}]
  %s5 = sld [smem:[#allocation0]]
  $region26: #{dueling_dqn_pallas.1} parent=0
    _
  %s7 = ssub.s32 1, %s5
  %s8 = scalar_select 0, %s7, %s5
  $region1: #{dueling_dqn_pallas.1} parent=0
    #allocation2 [shape = 'u8[1024]{0}', space=vmem, size = 0x400, scoped, tag = 'output window, operand 0, single buffered']
    #allocation3 [shape = 's32[1]{0}', space=sflag, size = 0x4, scoped, tag = 'scoped memory for dueling_dqn_pallas.1']
    %9 = vsyncpa [#allocation3], 0
    // Predicated region
    $region2: #{dueling_dqn_pallas.1} parent=1 // pred_check
      _
    $region3: #{dueling_dqn_pallas.1} parent=1 // pred_check_branch
      %11 = sbr.rel (0) target = $region5
    $region4: #{dueling_dqn_pallas.1} parent=1 // pred_region
      _
    $region5: #{dueling_dqn_pallas.1} parent=1 // pred_fallthru
      _
    // Predicated region
    $region6: #{dueling_dqn_pallas.1} parent=1 // pred_check
      _
    $region7: #{dueling_dqn_pallas.1} parent=1 // pred_check_branch
      %13 = sbr.rel (0) target = $region9
    $region8: #{dueling_dqn_pallas.1} parent=1 // pred_region
      _
    $region9: #{dueling_dqn_pallas.1} parent=1 // pred_fallthru
      _
    // Predicated region
    $region10: #{dueling_dqn_pallas.1} parent=1 // pred_check
      _
    $region11: #{dueling_dqn_pallas.1} parent=1 // pred_check_branch
      %15 = sbr.rel (0) target = $region13
    $region12: #{dueling_dqn_pallas.1} parent=1 // pred_region
      _
    $region13: #{dueling_dqn_pallas.1} parent=1 // pred_fallthru
      _
    // Predicated region
    $region14: #{dueling_dqn_pallas.1} parent=1 // pred_check
      _
    $region15: #{dueling_dqn_pallas.1} parent=1 // pred_check_branch
      %17 = sbr.rel (0) target = $region17
    $region16: #{dueling_dqn_pallas.1} parent=1 // pred_region
      _
    $region17: #{dueling_dqn_pallas.1} parent=1 // pred_fallthru
      _
    %v19 = vld [vmem:[%s0] sm:$0xf]
    %v20 = vld [vmem:[%s0 + $0x4] sm:$0xf]
    %v21 = vld [vmem:[%s0 + $0x8] sm:$0xf]
    %v22 = vld [vmem:[%s0 + $0xc] sm:$0xf]
    %v23 = vld [vmem:[%s3] sm:$0x1]
    %v24 = vld [vmem:[%s3 + $0x1] sm:$0x1]
    %v25 = vld [vmem:[%s3 + $0x2] sm:$0x1]
    %v26 = vld [vmem:[%s3 + $0x3] sm:$0x1]
    %v27 = vld [vmem:[%s1] sm:$0xf]
    %v28 = vld [vmem:[%s1 + $0x4] sm:$0xf]
    %v29 = vld [vmem:[%s1 + $0x8] sm:$0xf]
    %v30 = vld [vmem:[%s1 + $0xc] sm:$0xf]
    %v31 = vld [vmem:[%s1 + $0x10] sm:$0xf]
    %v36 = vunpack.c.l.b16 %v19
    %v37 = vunpack.c.l.b16 %v20
    %v38 = vunpack.c.l.b16 %v21
    %v39 = vunpack.c.l.b16 %v22
    %v40 = vpack.c.b16 %v37, %v36
    %v41 = vpack.c.b16 %v39, %v38
    %v47 = vunpack.c.l.b16 %v27
    %v48 = vunpack.c.l.b16 %v28
    %v49 = vunpack.c.l.b16 %v29
    %v50 = vunpack.c.l.b16 %v30
    %v51 = vunpack.c.l.b16 %v31
    %v52 = vpack.c.b16 %v48, %v47
    %v53 = vpack.c.b16 %v50, %v49
    %v54 = vpack.c.b16 %v51, %v51
    %vm57 = vcmask 326656
    %v59 = vsel %vm57, %v40, 0
    %v62 = vsel %vm57, %v41, 0
    %vm64 = vcmask 1043456
    %v66 = vsel %vm64, %v54, 0
    %68 = vmatprep.subr.bf16.mxu0 0
    %69 = vmatpush1.bf16.msra.mxu0 %v52
    %70 = vmatprep.subr.bf16.mxu0 0
    %71 = vmatpush1.bf16.msra.mxu0 %v53
    %72 = vmatprep.subr.bf16.mxu0 0
    %73 = vmatpush1.bf16.msra.mxu0 %v66
    %74 = vmatprep.subr.bf16.mxu0 0
    %75 = vmatpush1.bf16.msra.mxu0 0
    %76 = vmatprep.subr.bf16.mxu0 0
    %77 = vmatpush1.bf16.msra.mxu0 0
    %78 = vmatprep.subr.bf16.mxu0 0
    %79 = vmatpush1.bf16.msra.mxu0 0
    %80 = vmatprep.subr.bf16.mxu0 0
    %81 = vmatpush1.bf16.msra.mxu0 0
    %82 = vmatprep.subr.bf16.mxu0 0
    %83 = vmatpush1.bf16.msra.mxu0 0
    %84 = vmatprep.subr.bf16.mxu0 0
    %85 = vmatpush1.bf16.msra.mxu0 0
    %86 = vmatprep.subr.bf16.mxu0 0
    %87 = vmatpush1.bf16.msra.mxu0 0
    %88 = vmatprep.subr.bf16.mxu0 0
    %89 = vmatpush1.bf16.msra.mxu0 0
    %90 = vmatprep.subr.bf16.mxu0 0
    %91 = vmatpush1.bf16.msra.mxu0 0
    %92 = vmatprep.subr.bf16.mxu0 0
    %93 = vmatpush1.bf16.msra.mxu0 0
    %94 = vmatprep.subr.bf16.mxu0 0
    %95 = vmatpush1.bf16.msra.mxu0 0
    %96 = vmatprep.subr.bf16.mxu0 0
    %97 = vmatpush1.bf16.msra.mxu0 0
    %98 = vmatprep.subr.bf16.mxu0 0
    %99 = vmatpush1.bf16.msra.mxu0 0
    %100 = vmatprep.mubr.bf16.mxu0 0
    %101 = vmatmul.mubr.bf16.gmra.mrb[0].mxu0 %v59
    %v102 = vpop.f32.mrb[0].mxu0
    %v103 = vadd.f32 0.0, %v102
    %v104 = vpop.f32.mrb[0].mxu0
    %v105 = vpop.f32.mrb[0].mxu0
    %v106 = vadd.f32 0.0, %v105
    %v107 = vpop.f32.mrb[0].mxu0
    %108 = vmatprep.mubr.bf16.mxu0 0
    %109 = vmatmul.mubr.bf16.gmra.mrb[0].mxu0 %v62
    %v110 = vpop.f32.mrb[0].mxu0
    %v111 = vadd.f32 0.0, %v110
    %v112 = vpop.f32.mrb[0].mxu0
    %v113 = vpop.f32.mrb[0].mxu0
    %v114 = vadd.f32 0.0, %v113
    %v115 = vpop.f32.mrb[0].mxu0
    %116 = vdwg.mxu0
    %s117 = scalar_lea.vmem %s1, 20
    %v118 = vld [vmem:[%s117] sm:$0xf]
    %v119 = vld [vmem:[%s117 + $0x4] sm:$0xf]
    %v120 = vld [vmem:[%s117 + $0x8] sm:$0xf]
    %v121 = vld [vmem:[%s117 + $0xc] sm:$0xf]
    %v122 = vld [vmem:[%s117 + $0x10] sm:$0xf]
    %v128 = vunpack.c.l.b16 %v118
    %v129 = vunpack.c.l.b16 %v119
    %v130 = vunpack.c.l.b16 %v120
    %v131 = vunpack.c.l.b16 %v121
    %v132 = vunpack.c.l.b16 %v122
    %v133 = vpack.c.b16 %v129, %v128
    %v134 = vpack.c.b16 %v131, %v130
    %v135 = vpack.c.b16 %v132, %v132
    %v139 = vsel %vm64, %v135, 0
    %141 = vmatprep.subr.bf16.mxu0 0
    %142 = vmatpush1.bf16.msra.mxu0 %v133
    %143 = vmatprep.subr.bf16.mxu0 0
    %144 = vmatpush1.bf16.msra.mxu0 %v134
    %145 = vmatprep.subr.bf16.mxu0 0
    %146 = vmatpush1.bf16.msra.mxu0 %v139
    %147 = vmatprep.subr.bf16.mxu0 0
    %148 = vmatpush1.bf16.msra.mxu0 0
    %149 = vmatprep.subr.bf16.mxu0 0
    %150 = vmatpush1.bf16.msra.mxu0 0
    %151 = vmatprep.subr.bf16.mxu0 0
    %152 = vmatpush1.bf16.msra.mxu0 0
    %153 = vmatprep.subr.bf16.mxu0 0
    %154 = vmatpush1.bf16.msra.mxu0 0
    %155 = vmatprep.subr.bf16.mxu0 0
    %156 = vmatpush1.bf16.msra.mxu0 0
    %157 = vmatprep.subr.bf16.mxu0 0
    %158 = vmatpush1.bf16.msra.mxu0 0
    %159 = vmatprep.subr.bf16.mxu0 0
    %160 = vmatpush1.bf16.msra.mxu0 0
    %161 = vmatprep.subr.bf16.mxu0 0
    %162 = vmatpush1.bf16.msra.mxu0 0
    %163 = vmatprep.subr.bf16.mxu0 0
    %164 = vmatpush1.bf16.msra.mxu0 0
    %165 = vmatprep.subr.bf16.mxu0 0
    %166 = vmatpush1.bf16.msra.mxu0 0
    %167 = vmatprep.subr.bf16.mxu0 0
    %168 = vmatpush1.bf16.msra.mxu0 0
    %169 = vmatprep.subr.bf16.mxu0 0
    %170 = vmatpush1.bf16.msra.mxu0 0
    %171 = vmatprep.subr.bf16.mxu0 0
    %172 = vmatpush1.bf16.msra.mxu0 0
    %173 = vmatprep.mubr.bf16.mxu0 0
    %174 = vmatmul.mubr.bf16.gmra.mrb[0].mxu0 %v59
    %v175 = vpop.f32.mrb[0].mxu0
    %v176 = vadd.f32 0.0, %v175
    %v177 = vpop.f32.mrb[0].mxu0
    %v178 = vpop.f32.mrb[0].mxu0
    %v179 = vadd.f32 0.0, %v178
    %v180 = vpop.f32.mrb[0].mxu0
    %181 = vmatprep.mubr.bf16.mxu0 0
    %182 = vmatmul.mubr.bf16.gmra.mrb[0].mxu0 %v62
    %v183 = vpop.f32.mrb[0].mxu0
    %v184 = vadd.f32 0.0, %v183
    %v185 = vpop.f32.mrb[0].mxu0
    %v186 = vpop.f32.mrb[0].mxu0
    %v187 = vadd.f32 0.0, %v186
    %v188 = vpop.f32.mrb[0].mxu0
    %189 = vdwg.mxu0
    %v190 = vmax.f32 %v103, %v176
    %v191 = vmax.f32 %v106, %v179
    %v192 = vmax.f32 %v111, %v184
    %v193 = vmax.f32 %v114, %v187
    %v194 = vmax.f32 %v190, %v192
    %v195 = vmax.f32 %v191, %v193
    %v197 = vlaneseq
    %v198 = vshrl.u32 %v197, 7
    %v199 = vsub.s32 0, %v198
    %v200 = vrot.slane %v23, %v199
    %v202 = vadd.f32 %v194, %v200
    %v203 = vadd.f32 %v195, %v200
    %v204 = vmax.f32 %v202, 0.0
    %v205 = vmax.f32 %v203, 0.0
    %v206 = vrot.slane %v204, 1
    %v207 = vrot.slane %v205, 1
    %v208 = vlaneseq
    %v209 = vshrl.u32 %v208, 7
    %vm210 = vcmp.lt.s32.totalorder %v209, 7
    %v211 = vsel %vm210, %v206, %v207
    %v212 = vsel %vm210, %v207, %v206
    %v213 = vpack.c.bf16 %v205, %v204
    %v214 = vld [vmem:[%s2] sm:$0xf]
    %v215 = vld [vmem:[%s2 + $0x4] sm:$0xf]
    %v216 = vld [vmem:[%s2 + $0x8] sm:$0xf]
    %v217 = vld [vmem:[%s2 + $0xc] sm:$0xf]
    %v218 = vld [vmem:[%s2 + $0x10] sm:$0xf]
    %v219 = vld [vmem:[%s2 + $0x14] sm:$0xf]
    %v220 = vld [vmem:[%s2 + $0x18] sm:$0xf]
    %v221 = vld [vmem:[%s2 + $0x1c] sm:$0xf]
    %v222 = vld [vmem:[%s2 + $0x20] sm:$0xf]
    %v223 = vld [vmem:[%s2 + $0x24] sm:$0xf]
    %v224 = vld [vmem:[%s2 + $0x28] sm:$0xf]
    %v225 = vld [vmem:[%s2 + $0x2c] sm:$0xf]
    %v226 = vpack.c.bf16 %v212, %v211
    %v227 = vld [vmem:[%s2 + $0x30] sm:$0xf]
    %v228 = vld [vmem:[%s2 + $0x34] sm:$0xf]
    %v229 = vld [vmem:[%s2 + $0x38] sm:$0xf]
    %v230 = vld [vmem:[%s2 + $0x3c] sm:$0xf]
    %v231 = vld [vmem:[%s2 + $0x40] sm:$0xf]
    %v232 = vld [vmem:[%s2 + $0x44] sm:$0xf]
    %v233 = vld [vmem:[%s2 + $0x48] sm:$0xf]
    %v234 = vld [vmem:[%s2 + $0x4c] sm:$0xf]
    %v235 = vld [vmem:[%s2 + $0x50] sm:$0xf]
    %v236 = vld [vmem:[%s2 + $0x54] sm:$0xf]
    %v237 = vld [vmem:[%s2 + $0x58] sm:$0xf]
    %v238 = vld [vmem:[%s2 + $0x5c] sm:$0xf]
    %v251 = vunpack.c.l.b16 %v227
    %v252 = vunpack.c.l.b16 %v228
    %v253 = vunpack.c.l.b16 %v229
    %v254 = vunpack.c.l.b16 %v230
    %v255 = vunpack.c.l.b16 %v231
    %v256 = vunpack.c.l.b16 %v232
    %v257 = vunpack.c.l.b16 %v233
    %v258 = vunpack.c.l.b16 %v234
    %v259 = vunpack.c.l.b16 %v235
    %v260 = vunpack.c.l.b16 %v236
    %v261 = vunpack.c.l.b16 %v237
    %v262 = vunpack.c.l.b16 %v238
    %v263 = vpack.c.b16 %v252, %v251
    %v264 = vpack.c.b16 %v254, %v253
    %v265 = vpack.c.b16 %v256, %v255
    %v266 = vpack.c.b16 %v258, %v257
    %v267 = vpack.c.b16 %v260, %v259
    %v268 = vpack.c.b16 %v262, %v261
    %vm275 = vcmask 785408
    %v277 = vsel %vm275, %v226, 0
    %279 = vmatprep.subr.bf16.mxu0 0
    %280 = vmatpush1.bf16.msra.mxu0 %v263
    %281 = vmatprep.subr.bf16.mxu0 0
    %282 = vmatpush1.bf16.msra.mxu0 %v264
    %283 = vmatprep.subr.bf16.mxu0 0
    %284 = vmatpush1.bf16.msra.mxu0 %v265
    %285 = vmatprep.subr.bf16.mxu0 0
    %286 = vmatpush1.bf16.msra.mxu0 %v266
    %287 = vmatprep.subr.bf16.mxu0 0
    %288 = vmatpush1.bf16.msra.mxu0 %v267
    %289 = vmatprep.subr.bf16.mxu0 0
    %290 = vmatpush1.bf16.msra.mxu0 %v268
    %291 = vmatprep.subr.bf16.mxu0 0
    %292 = vmatpush1.bf16.msra.mxu0 0
    %293 = vmatprep.subr.bf16.mxu0 0
    %294 = vmatpush1.bf16.msra.mxu0 0
    %295 = vmatprep.subr.bf16.mxu0 0
    %296 = vmatpush1.bf16.msra.mxu0 0
    %297 = vmatprep.subr.bf16.mxu0 0
    %298 = vmatpush1.bf16.msra.mxu0 0
    %299 = vmatprep.subr.bf16.mxu0 0
    %300 = vmatpush1.bf16.msra.mxu0 0
    %301 = vmatprep.subr.bf16.mxu0 0
    %302 = vmatpush1.bf16.msra.mxu0 0
    %303 = vmatprep.subr.bf16.mxu0 0
    %304 = vmatpush1.bf16.msra.mxu0 0
    %305 = vmatprep.subr.bf16.mxu0 0
    %306 = vmatpush1.bf16.msra.mxu0 0
    %307 = vmatprep.subr.bf16.mxu0 0
    %308 = vmatpush1.bf16.msra.mxu0 0
    %309 = vmatprep.subr.bf16.mxu0 0
    %310 = vmatpush1.bf16.msra.mxu0 0
    %311 = vmatprep.mubr.bf16.mxu0 0
    %312 = vmatmul.mubr.bf16.gmra.mrb[0].mxu0 %v277
    %v313 = vpop.f32.mrb[0].mxu0
    %v314 = vadd.f32 0.0, %v313
    %v315 = vpop.f32.mrb[0].mxu0
    %v316 = vpop.f32.mrb[0].mxu0
    %v317 = vadd.f32 0.0, %v316
    %v318 = vpop.f32.mrb[0].mxu0
    %319 = vdwg.mxu0
    %v332 = vunpack.c.l.b16 %v214
    %v333 = vunpack.c.l.b16 %v215
    %v334 = vunpack.c.l.b16 %v216
    %v335 = vunpack.c.l.b16 %v217
    %v336 = vunpack.c.l.b16 %v218
    %v337 = vunpack.c.l.b16 %v219
    %v338 = vunpack.c.l.b16 %v220
    %v339 = vunpack.c.l.b16 %v221
    %v340 = vunpack.c.l.b16 %v222
    %v341 = vunpack.c.l.b16 %v223
    %v342 = vunpack.c.l.b16 %v224
    %v343 = vunpack.c.l.b16 %v225
    %v344 = vpack.c.b16 %v333, %v332
    %v345 = vpack.c.b16 %v335, %v334
    %v346 = vpack.c.b16 %v337, %v336
    %v347 = vpack.c.b16 %v339, %v338
    %v348 = vpack.c.b16 %v341, %v340
    %v349 = vpack.c.b16 %v343, %v342
    %v357 = vsel %vm275, %v213, 0
    %359 = vmatprep.subr.bf16.mxu0 0
    %360 = vmatpush1.bf16.msra.mxu0 %v344
    %361 = vmatprep.subr.bf16.mxu0 0
    %362 = vmatpush1.bf16.msra.mxu0 %v345
    %363 = vmatprep.subr.bf16.mxu0 0
    %364 = vmatpush1.bf16.msra.mxu0 %v346
    %365 = vmatprep.subr.bf16.mxu0 0
    %366 = vmatpush1.bf16.msra.mxu0 %v347
    %367 = vmatprep.subr.bf16.mxu0 0
    %368 = vmatpush1.bf16.msra.mxu0 %v348
    %369 = vmatprep.subr.bf16.mxu0 0
    %370 = vmatpush1.bf16.msra.mxu0 %v349
    %371 = vmatprep.subr.bf16.mxu0 0
    %372 = vmatpush1.bf16.msra.mxu0 0
    %373 = vmatprep.subr.bf16.mxu0 0
    %374 = vmatpush1.bf16.msra.mxu0 0
    %375 = vmatprep.subr.bf16.mxu0 0
    %376 = vmatpush1.bf16.msra.mxu0 0
    %377 = vmatprep.subr.bf16.mxu0 0
    %378 = vmatpush1.bf16.msra.mxu0 0
    %379 = vmatprep.subr.bf16.mxu0 0
    %380 = vmatpush1.bf16.msra.mxu0 0
    %381 = vmatprep.subr.bf16.mxu0 0
    %382 = vmatpush1.bf16.msra.mxu0 0
    %383 = vmatprep.subr.bf16.mxu0 0
    %384 = vmatpush1.bf16.msra.mxu0 0
    %385 = vmatprep.subr.bf16.mxu0 0
    %386 = vmatpush1.bf16.msra.mxu0 0
    %387 = vmatprep.subr.bf16.mxu0 0
    %388 = vmatpush1.bf16.msra.mxu0 0
    %389 = vmatprep.subr.bf16.mxu0 0
    %390 = vmatpush1.bf16.msra.mxu0 0
    %391 = vmatprep.mubr.bf16.mxu0 0
    %392 = vmatmul.mubr.bf16.gmra.mrb[0].mxu0 %v357
    %v393 = vpop.f32.mrb[0].mxu0
    %v394 = vadd.f32 %v314, %v393
    %v395 = vpop.f32.mrb[0].mxu0
    %v396 = vpop.f32.mrb[0].mxu0
    %v397 = vadd.f32 %v317, %v396
    %v398 = vpop.f32.mrb[0].mxu0
    %399 = vdwg.mxu0
    %402 = vrot.lane.b32.xlu0 %v394, 64
    %v403 = vpop.permute.xlu0 %402
    %404 = vrot.lane.b32.xlu0 %v397, 64
    %v405 = vpop.permute.xlu0 %404
    %v408 = vmax.f32 %v394, %v403
    %v409 = vmax.f32 %v397, %v405
    %v410 = vrot.slane %v408, 1
    %v411 = vrot.slane %v409, 1
    %v412 = vsel %vm210, %v410, %v411
    %v413 = vsel %vm210, %v411, %v410
    %v414 = vmax.f32 %v408, %v412
    %v415 = vmax.f32 %v409, %v413
    %v417 = vlaneseq
    %v418 = vshrl.u32 %v417, 7
    %v419 = vsub.s32 0, %v418
    %v420 = vrot.slane %v24, %v419
    %v422 = vadd.f32 %v414, %v420
    %v423 = vadd.f32 %v415, %v420
    %v424 = vmax.f32 %v422, 0.0
    %v425 = vmax.f32 %v423, 0.0
    %v426 = vpack.c.bf16 %v425, %v424
    %v427 = vld [vmem:[%s2 + $0x60] sm:$0xf]
    %v428 = vld [vmem:[%s2 + $0x64] sm:$0xf]
    %v429 = vld [vmem:[%s2 + $0x68] sm:$0xf]
    %v430 = vld [vmem:[%s2 + $0x6c] sm:$0xf]
    %v431 = vld [vmem:[%s2 + $0x70] sm:$0xf]
    %v432 = vld [vmem:[%s2 + $0x74] sm:$0xf]
    %v433 = vld [vmem:[%s2 + $0x78] sm:$0xf]
    %v434 = vld [vmem:[%s2 + $0x7c] sm:$0xf]
    %v435 = vrot.slane %v424, 2
    %v436 = vrot.slane %v425, 2
    %vm437 = vcmp.lt.s32.totalorder %v209, 6
    %v438 = vsel %vm437, %v435, %v436
    %v439 = vsel %vm437, %v436, %v435
    %v440 = vpack.c.bf16 %v439, %v438
    %v441 = vld [vmem:[%s2 + $0x80] sm:$0xf]
    %v442 = vld [vmem:[%s2 + $0x84] sm:$0xf]
    %v443 = vld [vmem:[%s2 + $0x88] sm:$0xf]
    %v444 = vld [vmem:[%s2 + $0x8c] sm:$0xf]
    %v445 = vld [vmem:[%s2 + $0x90] sm:$0xf]
    %v446 = vld [vmem:[%s2 + $0x94] sm:$0xf]
    %v447 = vld [vmem:[%s2 + $0x98] sm:$0xf]
    %v448 = vld [vmem:[%s2 + $0x9c] sm:$0xf]
    %v457 = vunpack.c.l.b16 %v441
    %v458 = vunpack.c.l.b16 %v442
    %v459 = vunpack.c.l.b16 %v443
    %v460 = vunpack.c.l.b16 %v444
    %v461 = vunpack.c.l.b16 %v445
    %v462 = vunpack.c.l.b16 %v446
    %v463 = vunpack.c.l.b16 %v447
    %v464 = vunpack.c.l.b16 %v448
    %v465 = vpack.c.b16 %v458, %v457
    %v466 = vpack.c.b16 %v460, %v459
    %v467 = vpack.c.b16 %v462, %v461
    %v468 = vpack.c.b16 %v464, %v463
    %vm473 = vcmask 523264
    %v475 = vsel %vm473, %v440, 0
    %477 = vmatprep.subr.bf16.mxu0 0
    %478 = vmatpush1.bf16.msra.mxu0 %v465
    %479 = vmatprep.subr.bf16.mxu0 0
    %480 = vmatpush1.bf16.msra.mxu0 %v466
    %481 = vmatprep.subr.bf16.mxu0 0
    %482 = vmatpush1.bf16.msra.mxu0 %v467
    %483 = vmatprep.subr.bf16.mxu0 0
    %484 = vmatpush1.bf16.msra.mxu0 %v468
    %485 = vmatprep.subr.bf16.mxu0 0
    %486 = vmatpush1.bf16.msra.mxu0 0
    %487 = vmatprep.subr.bf16.mxu0 0
    %488 = vmatpush1.bf16.msra.mxu0 0
    %489 = vmatprep.subr.bf16.mxu0 0
    %490 = vmatpush1.bf16.msra.mxu0 0
    %491 = vmatprep.subr.bf16.mxu0 0
    %492 = vmatpush1.bf16.msra.mxu0 0
    %493 = vmatprep.subr.bf16.mxu0 0
    %494 = vmatpush1.bf16.msra.mxu0 0
    %495 = vmatprep.subr.bf16.mxu0 0
    %496 = vmatpush1.bf16.msra.mxu0 0
    %497 = vmatprep.subr.bf16.mxu0 0
    %498 = vmatpush1.bf16.msra.mxu0 0
    %499 = vmatprep.subr.bf16.mxu0 0
    %500 = vmatpush1.bf16.msra.mxu0 0
    %501 = vmatprep.subr.bf16.mxu0 0
    %502 = vmatpush1.bf16.msra.mxu0 0
    %503 = vmatprep.subr.bf16.mxu0 0
    %504 = vmatpush1.bf16.msra.mxu0 0
    %505 = vmatprep.subr.bf16.mxu0 0
    %506 = vmatpush1.bf16.msra.mxu0 0
    %507 = vmatprep.subr.bf16.mxu0 0
    %508 = vmatpush1.bf16.msra.mxu0 0
    %509 = vmatprep.mubr.bf16.mxu0 0
    %510 = vmatmul.mubr.bf16.gmra.mrb[0].mxu0 %v475
    %v511 = vpop.f32.mrb[0].mxu0
    %v512 = vadd.f32 0.0, %v511
    %v513 = vpop.f32.mrb[0].mxu0
    %v514 = vpop.f32.mrb[0].mxu0
    %v515 = vadd.f32 0.0, %v514
    %v516 = vpop.f32.mrb[0].mxu0
    %517 = vdwg.mxu0
    %v526 = vunpack.c.l.b16 %v427
    %v527 = vunpack.c.l.b16 %v428
    %v528 = vunpack.c.l.b16 %v429
    %v529 = vunpack.c.l.b16 %v430
    %v530 = vunpack.c.l.b16 %v431
    %v531 = vunpack.c.l.b16 %v432
    %v532 = vunpack.c.l.b16 %v433
    %v533 = vunpack.c.l.b16 %v434
    %v534 = vpack.c.b16 %v527, %v526
    %v535 = vpack.c.b16 %v529, %v528
    %v536 = vpack.c.b16 %v531, %v530
    %v537 = vpack.c.b16 %v533, %v532
    %v543 = vsel %vm473, %v426, 0
    %545 = vmatprep.subr.bf16.mxu0 0
    %546 = vmatpush1.bf16.msra.mxu0 %v534
    %547 = vmatprep.subr.bf16.mxu0 0
    %548 = vmatpush1.bf16.msra.mxu0 %v535
    %549 = vmatprep.subr.bf16.mxu0 0
    %550 = vmatpush1.bf16.msra.mxu0 %v536
    %551 = vmatprep.subr.bf16.mxu0 0
    %552 = vmatpush1.bf16.msra.mxu0 %v537
    %553 = vmatprep.subr.bf16.mxu0 0
    %554 = vmatpush1.bf16.msra.mxu0 0
    %555 = vmatprep.subr.bf16.mxu0 0
    %556 = vmatpush1.bf16.msra.mxu0 0
    %557 = vmatprep.subr.bf16.mxu0 0
    %558 = vmatpush1.bf16.msra.mxu0 0
    %559 = vmatprep.subr.bf16.mxu0 0
    %560 = vmatpush1.bf16.msra.mxu0 0
    %561 = vmatprep.subr.bf16.mxu0 0
    %562 = vmatpush1.bf16.msra.mxu0 0
    %563 = vmatprep.subr.bf16.mxu0 0
    %564 = vmatpush1.bf16.msra.mxu0 0
    %565 = vmatprep.subr.bf16.mxu0 0
    %566 = vmatpush1.bf16.msra.mxu0 0
    %567 = vmatprep.subr.bf16.mxu0 0
    %568 = vmatpush1.bf16.msra.mxu0 0
    %569 = vmatprep.subr.bf16.mxu0 0
    %570 = vmatpush1.bf16.msra.mxu0 0
    %571 = vmatprep.subr.bf16.mxu0 0
    %572 = vmatpush1.bf16.msra.mxu0 0
    %573 = vmatprep.subr.bf16.mxu0 0
    %574 = vmatpush1.bf16.msra.mxu0 0
    %575 = vmatprep.subr.bf16.mxu0 0
    %576 = vmatpush1.bf16.msra.mxu0 0
    %577 = vmatprep.mubr.bf16.mxu0 0
    %578 = vmatmul.mubr.bf16.gmra.mrb[0].mxu0 %v543
    %v579 = vpop.f32.mrb[0].mxu0
    %v580 = vadd.f32 %v512, %v579
    %v581 = vpop.f32.mrb[0].mxu0
    %v582 = vpop.f32.mrb[0].mxu0
    %v583 = vadd.f32 %v515, %v582
    %v584 = vpop.f32.mrb[0].mxu0
    %585 = vdwg.mxu0
    %v586 = vrot.slane %v424, 4
    %v587 = vrot.slane %v425, 4
    %vm588 = vcmp.lt.s32.totalorder %v209, 4
    %v589 = vsel %vm588, %v586, %v587
    %v590 = vsel %vm588, %v587, %v586
    %v591 = vpack.c.bf16 %v590, %v589
    %v592 = vld [vmem:[%s2 + $0xa0] sm:$0xf]
    %v593 = vld [vmem:[%s2 + $0xa4] sm:$0xf]
    %v594 = vld [vmem:[%s2 + $0xa8] sm:$0xf]
    %v595 = vld [vmem:[%s2 + $0xac] sm:$0xf]
    %v596 = vld [vmem:[%s2 + $0xb0] sm:$0xf]
    %v597 = vld [vmem:[%s2 + $0xb4] sm:$0xf]
    %v598 = vld [vmem:[%s2 + $0xb8] sm:$0xf]
    %v599 = vld [vmem:[%s2 + $0xbc] sm:$0xf]
    %v608 = vunpack.c.l.b16 %v592
    %v609 = vunpack.c.l.b16 %v593
    %v610 = vunpack.c.l.b16 %v594
    %v611 = vunpack.c.l.b16 %v595
    %v612 = vunpack.c.l.b16 %v596
    %v613 = vunpack.c.l.b16 %v597
    %v614 = vunpack.c.l.b16 %v598
    %v615 = vunpack.c.l.b16 %v599
    %v616 = vpack.c.b16 %v609, %v608
    %v617 = vpack.c.b16 %v611, %v610
    %v618 = vpack.c.b16 %v613, %v612
    %v619 = vpack.c.b16 %v615, %v614
    %v625 = vsel %vm473, %v591, 0
    %627 = vmatprep.subr.bf16.mxu0 0
    %628 = vmatpush1.bf16.msra.mxu0 %v616
    %629 = vmatprep.subr.bf16.mxu0 0
    %630 = vmatpush1.bf16.msra.mxu0 %v617
    %631 = vmatprep.subr.bf16.mxu0 0
    %632 = vmatpush1.bf16.msra.mxu0 %v618
    %633 = vmatprep.subr.bf16.mxu0 0
    %634 = vmatpush1.bf16.msra.mxu0 %v619
    %635 = vmatprep.subr.bf16.mxu0 0
    %636 = vmatpush1.bf16.msra.mxu0 0
    %637 = vmatprep.subr.bf16.mxu0 0
    %638 = vmatpush1.bf16.msra.mxu0 0
    %639 = vmatprep.subr.bf16.mxu0 0
    %640 = vmatpush1.bf16.msra.mxu0 0
    %641 = vmatprep.subr.bf16.mxu0 0
    %642 = vmatpush1.bf16.msra.mxu0 0
    %643 = vmatprep.subr.bf16.mxu0 0
    %644 = vmatpush1.bf16.msra.mxu0 0
    %645 = vmatprep.subr.bf16.mxu0 0
    %646 = vmatpush1.bf16.msra.mxu0 0
    %647 = vmatprep.subr.bf16.mxu0 0
    %648 = vmatpush1.bf16.msra.mxu0 0
    %649 = vmatprep.subr.bf16.mxu0 0
    %650 = vmatpush1.bf16.msra.mxu0 0
    %651 = vmatprep.subr.bf16.mxu0 0
    %652 = vmatpush1.bf16.msra.mxu0 0
    %653 = vmatprep.subr.bf16.mxu0 0
    %654 = vmatpush1.bf16.msra.mxu0 0
    %655 = vmatprep.subr.bf16.mxu0 0
    %656 = vmatpush1.bf16.msra.mxu0 0
    %657 = vmatprep.subr.bf16.mxu0 0
    %658 = vmatpush1.bf16.msra.mxu0 0
    %659 = vmatprep.mubr.bf16.mxu0 0
    %660 = vmatmul.mubr.bf16.gmra.mrb[0].mxu0 %v625
    %v661 = vpop.f32.mrb[0].mxu0
    %v662 = vadd.f32 0.0, %v661
    %v663 = vpop.f32.mrb[0].mxu0
    %v664 = vpop.f32.mrb[0].mxu0
    %v665 = vadd.f32 0.0, %v664
    %v666 = vpop.f32.mrb[0].mxu0
    %667 = vdwg.mxu0
    %v668 = vadd.f32 %v580, %v662
    %v669 = vadd.f32 %v583, %v665
    %v671 = vlaneseq
    %v672 = vshrl.u32 %v671, 7
    %v673 = vsub.s32 0, %v672
    %v674 = vrot.slane %v25, %v673
    %v676 = vadd.f32 %v668, %v674
    %v677 = vadd.f32 %v669, %v674
    %v678 = vmax.f32 %v676, 0.0
    %v679 = vmax.f32 %v677, 0.0
    %v680 = vpack.c.bf16 %v679, %v678
    %v681 = vld [vmem:[%s2 + $0xc0] sm:$0xf]
    %v682 = vld [vmem:[%s2 + $0xc4] sm:$0xf]
    %v683 = vld [vmem:[%s2 + $0xc8] sm:$0xf]
    %v684 = vld [vmem:[%s2 + $0xcc] sm:$0xf]
    %v685 = vld [vmem:[%s2 + $0xd0] sm:$0xf]
    %v686 = vld [vmem:[%s2 + $0xd4] sm:$0xf]
    %v687 = vld [vmem:[%s2 + $0xd8] sm:$0xf]
    %v688 = vld [vmem:[%s2 + $0xdc] sm:$0xf]
    %v689 = vld [vmem:[%s2 + $0xe0] sm:$0xf]
    %v690 = vld [vmem:[%s2 + $0xe4] sm:$0xf]
    %v691 = vld [vmem:[%s2 + $0xe8] sm:$0xf]
    %v692 = vld [vmem:[%s2 + $0xec] sm:$0xf]
    %v693 = vld [vmem:[%s2 + $0xf0] sm:$0xf]
    %v694 = vld [vmem:[%s2 + $0xf4] sm:$0xf]
    %v695 = vld [vmem:[%s2 + $0xf8] sm:$0xf]
    %v696 = vld [vmem:[%s2 + $0xfc] sm:$0xf]
    %v713 = vunpack.c.l.b16 %v681
    %v714 = vunpack.c.l.b16 %v682
    %v715 = vunpack.c.l.b16 %v683
    %v716 = vunpack.c.l.b16 %v684
    %v717 = vunpack.c.l.b16 %v685
    %v718 = vunpack.c.l.b16 %v686
    %v719 = vunpack.c.l.b16 %v687
    %v720 = vunpack.c.l.b16 %v688
    %v721 = vunpack.c.l.b16 %v689
    %v722 = vunpack.c.l.b16 %v690
    %v723 = vunpack.c.l.b16 %v691
    %v724 = vunpack.c.l.b16 %v692
    %v725 = vunpack.c.l.b16 %v693
    %v726 = vunpack.c.l.b16 %v694
    %v727 = vunpack.c.l.b16 %v695
    %v728 = vunpack.c.l.b16 %v696
    %v729 = vpack.c.b16 %v714, %v713
    %v730 = vpack.c.b16 %v716, %v715
    %v731 = vpack.c.b16 %v718, %v717
    %v732 = vpack.c.b16 %v720, %v719
    %v733 = vpack.c.b16 %v722, %v721
    %v734 = vpack.c.b16 %v724, %v723
    %v735 = vpack.c.b16 %v726, %v725
    %v736 = vpack.c.b16 %v728, %v727
    %745 = vmatprep.subr.bf16.mxu0 0
    %746 = vmatpush1.bf16.msra.mxu0 %v729
    %747 = vmatprep.subr.bf16.mxu0 0
    %748 = vmatpush1.bf16.msra.mxu0 %v730
    %749 = vmatprep.subr.bf16.mxu0 0
    %750 = vmatpush1.bf16.msra.mxu0 %v731
    %751 = vmatprep.subr.bf16.mxu0 0
    %752 = vmatpush1.bf16.msra.mxu0 %v732
    %753 = vmatprep.subr.bf16.mxu0 0
    %754 = vmatpush1.bf16.msra.mxu0 %v733
    %755 = vmatprep.subr.bf16.mxu0 0
    %756 = vmatpush1.bf16.msra.mxu0 %v734
    %757 = vmatprep.subr.bf16.mxu0 0
    %758 = vmatpush1.bf16.msra.mxu0 %v735
    %759 = vmatprep.subr.bf16.mxu0 0
    %760 = vmatpush1.bf16.msra.mxu0 %v736
    %761 = vmatprep.subr.bf16.mxu0 0
    %762 = vmatpush1.bf16.msra.mxu0 0
    %763 = vmatprep.subr.bf16.mxu0 0
    %764 = vmatpush1.bf16.msra.mxu0 0
    %765 = vmatprep.subr.bf16.mxu0 0
    %766 = vmatpush1.bf16.msra.mxu0 0
    %767 = vmatprep.subr.bf16.mxu0 0
    %768 = vmatpush1.bf16.msra.mxu0 0
    %769 = vmatprep.subr.bf16.mxu0 0
    %770 = vmatpush1.bf16.msra.mxu0 0
    %771 = vmatprep.subr.bf16.mxu0 0
    %772 = vmatpush1.bf16.msra.mxu0 0
    %773 = vmatprep.subr.bf16.mxu0 0
    %774 = vmatpush1.bf16.msra.mxu0 0
    %775 = vmatprep.subr.bf16.mxu0 0
    %776 = vmatpush1.bf16.msra.mxu0 0
    %777 = vmatprep.mubr.bf16.mxu0 0
    %778 = vmatmul.mubr.bf16.gmra.mrb[0].mxu0 %v680
    %v779 = vpop.f32.mrb[0].mxu0
    %v780 = vadd.f32 0.0, %v779
    %v781 = vpop.f32.mrb[0].mxu0
    %v782 = vpop.f32.mrb[0].mxu0
    %v783 = vadd.f32 0.0, %v782
    %v784 = vpop.f32.mrb[0].mxu0
    %785 = vdwg.mxu0
    %v787 = vlaneseq
    %v788 = vshrl.u32 %v787, 7
    %v789 = vsub.s32 0, %v788
    %v790 = vrot.slane %v26, %v789
    %v792 = vadd.f32 %v780, %v790
    %v793 = vadd.f32 %v783, %v790
    %v795 = vrot.slane %v793, 7
    %vm797 = vcmask 1040384
    %v798 = vsel %vm797, %v792, %v795
    %vm799 = vcmask 25600
    %800 = vst.msk [vmem:[#allocation2] sm:$0x3] %vm799, %v798
    // Predicated region
    $region18: #{dueling_dqn_pallas.1} parent=1 // pred_check
      _
    $region19: #{dueling_dqn_pallas.1} parent=1 // pred_check_branch
      %802 = sbr.rel (0) target = $region21
    $region20: #{dueling_dqn_pallas.1} parent=1 // pred_region
      %s804 = ssub.s32 32, 32
      %805 = vsyncadd [#allocation3], %s804
      %s807 = sshll.u32 [#allocation2], 4
      %s808 = int_to_ptr.vmem [resolvable:$true] %s807
      %810 = dma.vmem_to_hbm [thread:$0]  %s808, 32, %s4, [#allocation3]
    $region21: #{dueling_dqn_pallas.1} parent=1 // pred_fallthru
      _
    // Predicated region
    $region22: #{dueling_dqn_pallas.1} parent=1 // pred_check
      _
    $region23: #{dueling_dqn_pallas.1} parent=1 // pred_check_branch
      %812 = sbr.rel (0) target = $region25
    $region24: #{dueling_dqn_pallas.1} parent=1 // pred_region
      %813 = dma.done [#allocation3], 32
    $region25: #{dueling_dqn_pallas.1} parent=1 // pred_fallthru
      _
    %814 = vsyncpa [#allocation3], 1

</llo_original>
